<compile_context>
chip_gen: v7x
topology: tpu7x:2x2x1
jax: 0.10.0
libtpu: 0.0.40
codegen_flags: <defaults>
</compile_context>

<pallas_src>
import functools

import jax
import jax.numpy as jnp
from jax.experimental import pallas as pl
from jax.experimental.pallas import tpu as pltpu

LN_EPS = 1e-5      # PyTorch nn.LayerNorm default
LANE = 128
SUBLANE = 8
# Batch-tile cap: 512 rows * 128 lanes * 4 B = 256 KiB per activation slab,
# comfortably inside the scoped VMEM of every generation (incl. v7x's 64 MiB
# physical / 32 MiB scoped) even with double-buffered input/output tiles.
DEFAULT_BLOCK_B = 512


def _round_up(n, m):
    return ((n + m - 1) // m) * m


def _layernorm(h, gamma, beta, n):
    """LayerNorm over the last axis, statistics taken over `n` live lanes.

    Padded lanes of `h` are zero, so sums over the full (padded) lane axis
    equal sums over the live lanes; dividing by `n` gives the exact PyTorch
    (biased-variance) statistics.  One-pass E[h^2] - mu^2 keeps the two
    cross-lane reductions independent.
    Zero-padded `gamma` re-zeroes the padded lanes on the way out.
    """
    inv_n = 1.0 / n
    s = jnp.sum(h, axis=-1, keepdims=True)
    ss = jnp.sum(h * h, axis=-1, keepdims=True)
    mu = s * inv_n
    var = ss * inv_n - mu * mu
    return (h - mu) * jax.lax.rsqrt(var + LN_EPS) * gamma + beta


def verifier_kernel(
    x_ref,
    w1_ref, b1_ref, g1_ref, be1_ref,
    w2_ref, b2_ref, g2_ref, be2_ref,
    w3_ref, b3_ref,
    o_ref,
    *, h_actual,
):
    # Matmul operands stay in their stored dtype (f32 or bf16); accumulation
    # and the whole elementwise chain are f32 (bias/LN params are f32 refs).
    x = x_ref[...]

    # --- Linear 1 + LayerNorm + ReLU -------------------------------------
    h = jnp.dot(x, w1_ref[...], preferred_element_type=jnp.float32) + b1_ref[...]
    h = _layernorm(h, g1_ref[...], be1_ref[...], h_actual)
    h = jnp.maximum(h, 0.0)

    # --- Linear 2 + LayerNorm + ReLU -------------------------------------
    h2 = jnp.dot(h.astype(w2_ref.dtype), w2_ref[...],
                 preferred_element_type=jnp.float32) + b2_ref[...]
    h2 = _layernorm(h2, g2_ref[...], be2_ref[...], h_actual)
    h2 = jnp.maximum(h2, 0.0)

    # --- Linear 3 (head, lane-padded to 128 columns) ----------------------
    out = jnp.dot(h2.astype(w3_ref.dtype), w3_ref[...],
                  preferred_element_type=jnp.float32) + b3_ref[...]
    o_ref[...] = out.astype(o_ref.dtype)


def verifier_regressor_forward(x, params, *, block_b=None, operand_dtype=None):
    """Run the VerifierRegressor forward pass via a Pallas kernel.

    x: (B, D) float32
    params: dict of weights/biases/ln params (see init_params), weights stored
            as (in_features, out_features).
    operand_dtype: dtype for x / W1 / W2 / W3 inside the kernel (e.g.
            jnp.bfloat16 on v6e/v7x to halve HBM traffic). Matmuls still
            accumulate in f32; LN/ReLU stay f32.  Default: x.dtype.
    Returns (B, 3) float32.
    """
    B, D = x.shape
    H = params["w1"].shape[1]
    O = params["w3"].shape[1]

    if operand_dtype is None:
        operand_dtype = x.dtype

    # ---- lane-dense padded sizes -----------------------------------------
    D_pad = _round_up(max(D, 1), LANE)
    H_pad = _round_up(max(H, 1), LANE)
    O_pad = _round_up(max(O, 1), LANE)

    # ---- bounded batch tile ------------------------------------------------
    if block_b is None:
        block_b = min(DEFAULT_BLOCK_B, _round_up(B, SUBLANE))
    assert block_b % SUBLANE == 0, "block_b must be a multiple of 8"
    B_pad = _round_up(B, block_b)
    grid = (B_pad // block_b,)

    # ---- pad inputs / params (zero padding is exact on the live lanes) ----
    def pad2(a, rows, cols, dtype=None):
        if dtype is not None:
            a = a.astype(dtype)
        return jnp.pad(a, ((0, rows - a.shape[0]), (0, cols - a.shape[1])))

    f32 = jnp.float32
    x_p = pad2(x, B_pad, D_pad, operand_dtype)
    w1 = pad2(params["w1"], D_pad, H_pad, operand_dtype)
    w2 = pad2(params["w2"], H_pad, H_pad, operand_dtype)
    w3 = pad2(params["w3"], H_pad, O_pad, operand_dtype)
    b1 = pad2(params["b1"], 1, H_pad, f32)
    g1 = pad2(params["g1"], 1, H_pad, f32)    # zero-padded gamma zeroes pad lanes
    be1 = pad2(params["be1"], 1, H_pad, f32)
    b2 = pad2(params["b2"], 1, H_pad, f32)
    g2 = pad2(params["g2"], 1, H_pad, f32)
    be2 = pad2(params["be2"], 1, H_pad, f32)
    b3 = pad2(params["b3"], 1, O_pad, f32)

    # ---- BlockSpecs ---------------------------------------------------------
    def full(shape):
        nd = len(shape)
        return pl.BlockSpec(shape, lambda i, _nd=nd: (0,) * _nd)

    in_specs = [
        pl.BlockSpec((block_b, D_pad), lambda i: (i, 0)),            # x tile
        full((D_pad, H_pad)), full((1, H_pad)), full((1, H_pad)), full((1, H_pad)),
        full((H_pad, H_pad)), full((1, H_pad)), full((1, H_pad)), full((1, H_pad)),
        full((H_pad, O_pad)), full((1, O_pad)),
    ]
    out_spec = pl.BlockSpec((block_b, O_pad), lambda i: (i, 0))      # lane-dense

    # ---- advisory cost estimate for XLA scheduling --------------------------
    itemsize = jnp.dtype(operand_dtype).itemsize
    flops = 2 * B_pad * (D_pad * H_pad + H_pad * H_pad + H_pad * O_pad)
    bytes_accessed = (
        B_pad * D_pad * itemsize                      # x in
        + B_pad * O_pad * 4                           # out
        + (D_pad * H_pad + H_pad * H_pad + H_pad * O_pad) * itemsize   # weights
        + (7 * H_pad + O_pad) * 4                     # biases / LN params
    )
    cost = pl.CostEstimate(
        flops=flops, transcendentals=2 * B_pad, bytes_accessed=bytes_accessed)

    out_padded = pl.pallas_call(
        functools.partial(verifier_kernel, h_actual=H),
        out_shape=jax.ShapeDtypeStruct((B_pad, O_pad), jnp.float32),
        grid_spec=pltpu.PrefetchScalarGridSpec(
            num_scalar_prefetch=0,
            grid=grid,
            in_specs=in_specs,
            out_specs=out_spec,
        ),
        compiler_params=pltpu.CompilerParams(
            dimension_semantics=("parallel",),        # shards across TCs on v7x
            vmem_limit_bytes=32 * 1024 * 1024,
        ),
        cost_estimate=cost,
    )(
        x_p,
        w1, b1, g1, be1,
        w2, b2, g2, be2,
        w3, b3,
    )
    return out_padded[:B, :O]


def init_params(key, input_dim, hidden_dim=64, out_dim=3):
    """Deterministic init mimicking PyTorch defaults:
    Linear: U(-1/sqrt(fan_in), 1/sqrt(fan_in)) for weight and bias.
    LayerNorm: gamma=1, beta=0.  Weights stored as (in, out)."""
    ks = jax.random.split(key, 6)

    def linear(kw, kb, fan_in, fan_out):
        bound = 1.0 / jnp.sqrt(fan_in)
        w = jax.random.uniform(kw, (fan_in, fan_out), jnp.float32, -bound, bound)
        b = jax.random.uniform(kb, (1, fan_out), jnp.float32, -bound, bound)
        return w, b

    w1, b1 = linear(ks[0], ks[1], input_dim, hidden_dim)
    w2, b2 = linear(ks[2], ks[3], hidden_dim, hidden_dim)
    w3, b3 = linear(ks[4], ks[5], hidden_dim, out_dim)

    ones = jnp.ones((1, hidden_dim), jnp.float32)
    zeros = jnp.zeros((1, hidden_dim), jnp.float32)
    return dict(
        w1=w1, b1=b1, g1=ones, be1=zeros,
        w2=w2, b2=b2, g2=ones, be2=zeros,
        w3=w3, b3=b3,
    )


def _reference_forward(x, p):
    """Pure-JAX reference (same LN formulation) for correctness checking."""
    H = p["w1"].shape[1]
    h = x @ p["w1"] + p["b1"]
    h = _layernorm(h, p["g1"], p["be1"], H)
    h = jnp.maximum(h, 0.0)
    h = h @ p["w2"] + p["b2"]
    h = _layernorm(h, p["g2"], p["be2"], H)
    h = jnp.maximum(h, 0.0)
    return h @ p["w3"] + p["b3"]


if __name__ == "__main__":
    key = jax.random.PRNGKey(0)
    k_x, k_p = jax.random.split(key)

    batch = 8
    input_dim = 32
    hidden_dim = 64

    x = jax.random.normal(k_x, (batch, input_dim), jnp.float32)
    params = init_params(k_p, input_dim, hidden_dim)

    ref = jax.block_until_ready(_reference_forward(x, params))

    # f32 operands: must match the reference tightly.
    out = jax.block_until_ready(verifier_regressor_forward(x, params))
    assert out.shape == (batch, 3)
    assert jnp.allclose(out, ref, atol=1e-4, rtol=1e-4), "f32 mismatch vs reference"

    # bf16 operands (the v6e/v7x fast path): looser tolerance, f32 accumulation.
    out_bf16 = jax.block_until_ready(
        verifier_regressor_forward(x, params, operand_dtype=jnp.bfloat16))
    assert out_bf16.shape == (batch, 3)
    assert jnp.allclose(out_bf16, ref, atol=5e-2, rtol=5e-2), "bf16 mismatch vs reference"

    print("KERNEL_OK")
</pallas_src>

<mosaic_0001>
module attributes {stable_mosaic.version = 11 : i64} {
  func.func @verifier_kernel(%arg0: i32, %arg1: memref<8x128xf32, #tpu.memory_space<vmem>>, %arg2: memref<128x128xf32, #tpu.memory_space<vmem>>, %arg3: memref<1x128xf32, #tpu.memory_space<vmem>>, %arg4: memref<1x128xf32, #tpu.memory_space<vmem>>, %arg5: memref<1x128xf32, #tpu.memory_space<vmem>>, %arg6: memref<128x128xf32, #tpu.memory_space<vmem>>, %arg7: memref<1x128xf32, #tpu.memory_space<vmem>>, %arg8: memref<1x128xf32, #tpu.memory_space<vmem>>, %arg9: memref<1x128xf32, #tpu.memory_space<vmem>>, %arg10: memref<128x128xf32, #tpu.memory_space<vmem>>, %arg11: memref<1x128xf32, #tpu.memory_space<vmem>>, %arg12: memref<8x128xf32, #tpu.memory_space<vmem>>) attributes {dimension_semantics = [#tpu.dimension_semantics<parallel>], iteration_bounds = array<i64: 1>, scalar_prefetch = 0 : i64, scratch_operands = 0 : i64, tpu.core_type = #tpu.core_type<tc>, window_params = [{transform_indices = @transform_0, window_bounds = array<i64: 8, 128>}, {pipeline_mode = #tpu.pipeline_mode<synchronous>, transform_indices = @transform_1, window_bounds = array<i64: 128, 128>}, {pipeline_mode = #tpu.pipeline_mode<synchronous>, transform_indices = @transform_2, window_bounds = array<i64: 1, 128>}, {pipeline_mode = #tpu.pipeline_mode<synchronous>, transform_indices = @transform_3, window_bounds = array<i64: 1, 128>}, {pipeline_mode = #tpu.pipeline_mode<synchronous>, transform_indices = @transform_4, window_bounds = array<i64: 1, 128>}, {pipeline_mode = #tpu.pipeline_mode<synchronous>, transform_indices = @transform_5, window_bounds = array<i64: 128, 128>}, {pipeline_mode = #tpu.pipeline_mode<synchronous>, transform_indices = @transform_6, window_bounds = array<i64: 1, 128>}, {pipeline_mode = #tpu.pipeline_mode<synchronous>, transform_indices = @transform_7, window_bounds = array<i64: 1, 128>}, {pipeline_mode = #tpu.pipeline_mode<synchronous>, transform_indices = @transform_8, window_bounds = array<i64: 1, 128>}, {pipeline_mode = #tpu.pipeline_mode<synchronous>, transform_indices = @transform_9, window_bounds = array<i64: 128, 128>}, {pipeline_mode = #tpu.pipeline_mode<synchronous>, transform_indices = @transform_10, window_bounds = array<i64: 1, 128>}, {transform_indices = @transform_11, window_bounds = array<i64: 8, 128>}]} {
    %c0 = arith.constant 0 : index
    %c0_0 = arith.constant 0 : index
    %0 = vector.load %arg1[%c0, %c0_0] : memref<8x128xf32, #tpu.memory_space<vmem>>, vector<8x128xf32>
    %c0_1 = arith.constant 0 : index
    %c0_2 = arith.constant 0 : index
    %1 = vector.load %arg2[%c0_1, %c0_2] : memref<128x128xf32, #tpu.memory_space<vmem>>, vector<128x128xf32>
    %cst = arith.constant dense<0.000000e+00> : vector<8x128xf32>
    %2 = tpu.matmul %0, %1, %cst {dimension_numbers = #tpu.dot_dimension_numbers<[1], [0], [0], [1], [0, 0, 1, 1], [], []>} : vector<8x128xf32>, vector<128x128xf32>, vector<8x128xf32> -> vector<8x128xf32>
    %c0_3 = arith.constant 0 : index
    %c0_4 = arith.constant 0 : index
    %3 = vector.load %arg3[%c0_3, %c0_4] : memref<1x128xf32, #tpu.memory_space<vmem>>, vector<1x128xf32>
    %4 = vector.broadcast %3 : vector<1x128xf32> to vector<8x128xf32>
    %5 = arith.addf %2, %4 : vector<8x128xf32>
    %c0_5 = arith.constant 0 : index
    %c0_6 = arith.constant 0 : index
    %6 = vector.load %arg4[%c0_5, %c0_6] : memref<1x128xf32, #tpu.memory_space<vmem>>, vector<1x128xf32>
    %c0_7 = arith.constant 0 : index
    %c0_8 = arith.constant 0 : index
    %7 = vector.load %arg5[%c0_7, %c0_8] : memref<1x128xf32, #tpu.memory_space<vmem>>, vector<1x128xf32>
    %cst_9 = arith.constant dense<0.000000e+00> : vector<8xf32>
    %8 = vector.multi_reduction <add>, %5, %cst_9 [1] : vector<8x128xf32> to vector<8xf32>
    %9 = vector.shape_cast %8 : vector<8xf32> to vector<8x1xf32>
    %10 = arith.mulf %5, %5 : vector<8x128xf32>
    %cst_10 = arith.constant dense<0.000000e+00> : vector<8xf32>
    %11 = vector.multi_reduction <add>, %10, %cst_10 [1] : vector<8x128xf32> to vector<8xf32>
    %12 = vector.shape_cast %11 : vector<8xf32> to vector<8x1xf32>
    %cst_11 = arith.constant 1.562500e-02 : f32
    %13 = vector.broadcast %cst_11 : f32 to vector<8x1xf32>
    %14 = arith.mulf %9, %13 : vector<8x1xf32>
    %cst_12 = arith.constant 1.562500e-02 : f32
    %15 = vector.broadcast %cst_12 : f32 to vector<8x1xf32>
    %16 = arith.mulf %12, %15 : vector<8x1xf32>
    %17 = arith.mulf %14, %14 : vector<8x1xf32>
    %18 = arith.subf %16, %17 : vector<8x1xf32>
    %19 = vector.broadcast %14 : vector<8x1xf32> to vector<8x128xf32>
    %20 = arith.subf %5, %19 : vector<8x128xf32>
    %cst_13 = arith.constant 9.99999974E-6 : f32
    %21 = vector.broadcast %cst_13 : f32 to vector<8x1xf32>
    %22 = arith.addf %18, %21 : vector<8x1xf32>
    %23 = math.rsqrt %22 : vector<8x1xf32>
    %24 = vector.broadcast %23 : vector<8x1xf32> to vector<8x128xf32>
    %25 = arith.mulf %20, %24 : vector<8x128xf32>
    %26 = vector.broadcast %6 : vector<1x128xf32> to vector<8x128xf32>
    %27 = arith.mulf %25, %26 : vector<8x128xf32>
    %28 = vector.broadcast %7 : vector<1x128xf32> to vector<8x128xf32>
    %29 = arith.addf %27, %28 : vector<8x128xf32>
    %cst_14 = arith.constant 0.000000e+00 : f32
    %30 = vector.broadcast %cst_14 : f32 to vector<8x128xf32>
    %31 = arith.maximumf %29, %30 : vector<8x128xf32>
    %c0_15 = arith.constant 0 : index
    %c0_16 = arith.constant 0 : index
    %32 = vector.load %arg6[%c0_15, %c0_16] : memref<128x128xf32, #tpu.memory_space<vmem>>, vector<128x128xf32>
    %cst_17 = arith.constant dense<0.000000e+00> : vector<8x128xf32>
    %33 = tpu.matmul %31, %32, %cst_17 {dimension_numbers = #tpu.dot_dimension_numbers<[1], [0], [0], [1], [0, 0, 1, 1], [], []>} : vector<8x128xf32>, vector<128x128xf32>, vector<8x128xf32> -> vector<8x128xf32>
    %c0_18 = arith.constant 0 : index
    %c0_19 = arith.constant 0 : index
    %34 = vector.load %arg7[%c0_18, %c0_19] : memref<1x128xf32, #tpu.memory_space<vmem>>, vector<1x128xf32>
    %35 = vector.broadcast %34 : vector<1x128xf32> to vector<8x128xf32>
    %36 = arith.addf %33, %35 : vector<8x128xf32>
    %c0_20 = arith.constant 0 : index
    %c0_21 = arith.constant 0 : index
    %37 = vector.load %arg8[%c0_20, %c0_21] : memref<1x128xf32, #tpu.memory_space<vmem>>, vector<1x128xf32>
    %c0_22 = arith.constant 0 : index
    %c0_23 = arith.constant 0 : index
    %38 = vector.load %arg9[%c0_22, %c0_23] : memref<1x128xf32, #tpu.memory_space<vmem>>, vector<1x128xf32>
    %cst_24 = arith.constant dense<0.000000e+00> : vector<8xf32>
    %39 = vector.multi_reduction <add>, %36, %cst_24 [1] : vector<8x128xf32> to vector<8xf32>
    %40 = vector.shape_cast %39 : vector<8xf32> to vector<8x1xf32>
    %41 = arith.mulf %36, %36 : vector<8x128xf32>
    %cst_25 = arith.constant dense<0.000000e+00> : vector<8xf32>
    %42 = vector.multi_reduction <add>, %41, %cst_25 [1] : vector<8x128xf32> to vector<8xf32>
    %43 = vector.shape_cast %42 : vector<8xf32> to vector<8x1xf32>
    %cst_26 = arith.constant 1.562500e-02 : f32
    %44 = vector.broadcast %cst_26 : f32 to vector<8x1xf32>
    %45 = arith.mulf %40, %44 : vector<8x1xf32>
    %cst_27 = arith.constant 1.562500e-02 : f32
    %46 = vector.broadcast %cst_27 : f32 to vector<8x1xf32>
    %47 = arith.mulf %43, %46 : vector<8x1xf32>
    %48 = arith.mulf %45, %45 : vector<8x1xf32>
    %49 = arith.subf %47, %48 : vector<8x1xf32>
    %50 = vector.broadcast %45 : vector<8x1xf32> to vector<8x128xf32>
    %51 = arith.subf %36, %50 : vector<8x128xf32>
    %cst_28 = arith.constant 9.99999974E-6 : f32
    %52 = vector.broadcast %cst_28 : f32 to vector<8x1xf32>
    %53 = arith.addf %49, %52 : vector<8x1xf32>
    %54 = math.rsqrt %53 : vector<8x1xf32>
    %55 = vector.broadcast %54 : vector<8x1xf32> to vector<8x128xf32>
    %56 = arith.mulf %51, %55 : vector<8x128xf32>
    %57 = vector.broadcast %37 : vector<1x128xf32> to vector<8x128xf32>
    %58 = arith.mulf %56, %57 : vector<8x128xf32>
    %59 = vector.broadcast %38 : vector<1x128xf32> to vector<8x128xf32>
    %60 = arith.addf %58, %59 : vector<8x128xf32>
    %cst_29 = arith.constant 0.000000e+00 : f32
    %61 = vector.broadcast %cst_29 : f32 to vector<8x128xf32>
    %62 = arith.maximumf %60, %61 : vector<8x128xf32>
    %c0_30 = arith.constant 0 : index
    %c0_31 = arith.constant 0 : index
    %63 = vector.load %arg10[%c0_30, %c0_31] : memref<128x128xf32, #tpu.memory_space<vmem>>, vector<128x128xf32>
    %cst_32 = arith.constant dense<0.000000e+00> : vector<8x128xf32>
    %64 = tpu.matmul %62, %63, %cst_32 {dimension_numbers = #tpu.dot_dimension_numbers<[1], [0], [0], [1], [0, 0, 1, 1], [], []>} : vector<8x128xf32>, vector<128x128xf32>, vector<8x128xf32> -> vector<8x128xf32>
    %c0_33 = arith.constant 0 : index
    %c0_34 = arith.constant 0 : index
    %65 = vector.load %arg11[%c0_33, %c0_34] : memref<1x128xf32, #tpu.memory_space<vmem>>, vector<1x128xf32>
    %66 = vector.broadcast %65 : vector<1x128xf32> to vector<8x128xf32>
    %67 = arith.addf %64, %66 : vector<8x128xf32>
    %c0_35 = arith.constant 0 : index
    %c0_36 = arith.constant 0 : index
    %68 = vector.load %arg12[%c0_35, %c0_36] : memref<8x128xf32, #tpu.memory_space<vmem>>, vector<8x128xf32>
    tpu.vector_store %arg12[%c0_35, %c0_36], %67 {strides = array<i32>} : memref<8x128xf32, #tpu.memory_space<vmem>>, vector<8x128xf32>,
    return
  }
  func.func @transform_0(%arg0: i32) -> (i32, i32) {
    %c0_i32 = arith.constant 0 : i32
    %c0_i32_0 = arith.constant 0 : i32
    return %arg0, %c0_i32 : i32, i32
  }
  func.func @transform_1(%arg0: i32) -> (i32, i32) {
    %c0_i32 = arith.constant 0 : i32
    %c0_i32_0 = arith.constant 0 : i32
    %c0_i32_1 = arith.constant 0 : i32
    return %c0_i32, %c0_i32_0 : i32, i32
  }
  func.func @transform_2(%arg0: i32) -> (i32, i32) {
    %c0_i32 = arith.constant 0 : i32
    %c0_i32_0 = arith.constant 0 : i32
    %c0_i32_1 = arith.constant 0 : i32
    return %c0_i32, %c0_i32_0 : i32, i32
  }
  func.func @transform_3(%arg0: i32) -> (i32, i32) {
    %c0_i32 = arith.constant 0 : i32
    %c0_i32_0 = arith.constant 0 : i32
    %c0_i32_1 = arith.constant 0 : i32
    return %c0_i32, %c0_i32_0 : i32, i32
  }
  func.func @transform_4(%arg0: i32) -> (i32, i32) {
    %c0_i32 = arith.constant 0 : i32
    %c0_i32_0 = arith.constant 0 : i32
    %c0_i32_1 = arith.constant 0 : i32
    return %c0_i32, %c0_i32_0 : i32, i32
  }
  func.func @transform_5(%arg0: i32) -> (i32, i32) {
    %c0_i32 = arith.constant 0 : i32
    %c0_i32_0 = arith.constant 0 : i32
    %c0_i32_1 = arith.constant 0 : i32
    return %c0_i32, %c0_i32_0 : i32, i32
  }
  func.func @transform_6(%arg0: i32) -> (i32, i32) {
    %c0_i32 = arith.constant 0 : i32
    %c0_i32_0 = arith.constant 0 : i32
    %c0_i32_1 = arith.constant 0 : i32
    return %c0_i32, %c0_i32_0 : i32, i32
  }
  func.func @transform_7(%arg0: i32) -> (i32, i32) {
    %c0_i32 = arith.constant 0 : i32
    %c0_i32_0 = arith.constant 0 : i32
    %c0_i32_1 = arith.constant 0 : i32
    return %c0_i32, %c0_i32_0 : i32, i32
  }
  func.func @transform_8(%arg0: i32) -> (i32, i32) {
    %c0_i32 = arith.constant 0 : i32
    %c0_i32_0 = arith.constant 0 : i32
    %c0_i32_1 = arith.constant 0 : i32
    return %c0_i32, %c0_i32_0 : i32, i32
  }
  func.func @transform_9(%arg0: i32) -> (i32, i32) {
    %c0_i32 = arith.constant 0 : i32
    %c0_i32_0 = arith.constant 0 : i32
    %c0_i32_1 = arith.constant 0 : i32
    return %c0_i32, %c0_i32_0 : i32, i32
  }
  func.func @transform_10(%arg0: i32) -> (i32, i32) {
    %c0_i32 = arith.constant 0 : i32
    %c0_i32_0 = arith.constant 0 : i32
    %c0_i32_1 = arith.constant 0 : i32
    return %c0_i32, %c0_i32_0 : i32, i32
  }
  func.func @transform_11(%arg0: i32) -> (i32, i32) {
    %c0_i32 = arith.constant 0 : i32
    %c0_i32_0 = arith.constant 0 : i32
    return %arg0, %c0_i32 : i32, i32
  }
}

</mosaic_0001>

<llo_original>
// kernel: tpu_custom_call.1
$region0: #{tpu_custom_call.1}
  #allocation0 [shape = 'u32[]', space=smem, size = 0x4, offset = 0x4, fixed_abs, tag = 'smem constant byte address 0x4 - core index']
  #allocation1 [shape = 'u32[144,128]{1,0:T(1,128)}', space=vmem, size = 0x12000, scoped, tag = 'internal scratch']
  %s0 = inlined_call_operand.hbm [shape: f32[8,128], index: 0, kind: input, shape index: {}]
  %s1 = inlined_call_operand.hbm [shape: f32[128,128], index: 1, kind: input, shape index: {}]
  %s2 = inlined_call_operand.vmem [shape: f32[1,128], index: 2, kind: input, shape index: {}]
  %s3 = inlined_call_operand.vmem [shape: f32[1,128], index: 3, kind: input, shape index: {}]
  %s4 = inlined_call_operand.vmem [shape: f32[1,128], index: 4, kind: input, shape index: {}]
  %s5 = inlined_call_operand.hbm [shape: f32[128,128], index: 5, kind: input, shape index: {}]
  %s6 = inlined_call_operand.vmem [shape: f32[1,128], index: 6, kind: input, shape index: {}]
  %s7 = inlined_call_operand.vmem [shape: f32[1,128], index: 7, kind: input, shape index: {}]
  %s8 = inlined_call_operand.vmem [shape: f32[1,128], index: 8, kind: input, shape index: {}]
  %s9 = inlined_call_operand.hbm [shape: f32[128,128], index: 9, kind: input, shape index: {}]
  %s10 = inlined_call_operand.vmem [shape: f32[1,128], index: 10, kind: input, shape index: {}]
  %s11 = inlined_call_operand.hbm [shape: f32[8,128], index: 11, kind: output, shape index: {}]
  %s12 = sld [smem:[#allocation0]]
  $region70: #{tpu_custom_call.1} parent=0
    _
  %s14 = ssub.s32 1, %s12
  %s15 = scalar_select 0, %s14, %s12
  $region1: #{tpu_custom_call.1} parent=0
    #allocation2 [shape = 'u8[4096]{0}', space=vmem, size = 0x1000, scoped, tag = 'input window, operand 0, single buffered']
    #allocation3 [shape = 's32[1]{0}', space=sflag, size = 0x4, scoped, tag = 'scoped memory for tpu_custom_call.1']
    #allocation4 [shape = 's32[1]{0}', space=sflag, size = 0x4, scoped, tag = 'scoped memory for tpu_custom_call.1']
    #allocation5 [shape = 'u8[65536]{0}', space=vmem, size = 0x10000, scoped, tag = 'input window, operand 1, single buffered']
    #allocation6 [shape = 's32[1]{0}', space=sflag, size = 0x4, scoped, tag = 'scoped memory for tpu_custom_call.1']
    #allocation7 [shape = 'u8[65536]{0}', space=vmem, size = 0x10000, scoped, tag = 'input window, operand 5, single buffered']
    #allocation8 [shape = 'u8[65536]{0}', space=vmem, size = 0x10000, scoped, tag = 'input window, operand 9, single buffered']
    #allocation9 [shape = 's32[1]{0}', space=sflag, size = 0x4, scoped, tag = 'scoped memory for tpu_custom_call.1']
    #allocation10 [shape = 'u8[4096]{0}', space=vmem, size = 0x1000, scoped, tag = 'output window, operand 0, single buffered']
    %16 = vsyncpa [#allocation3], 0
    %17 = vsyncpa [#allocation6], 0
    %18 = vsyncpa [#allocation9], 0
    %19 = vsyncpa [#allocation4], 0
    // Predicated region
    $region2: #{tpu_custom_call.1} parent=1 // pred_check
      _
    $region3: #{tpu_custom_call.1} parent=1 // pred_check_branch
      %21 = sbr.rel (0) target = $region5
    $region4: #{tpu_custom_call.1} parent=1 // pred_region
      %s23 = ssub.s32 128, 128
      %24 = vsyncadd [#allocation3], %s23
      %s26 = sshll.u32 [#allocation2], 4
      %s27 = int_to_ptr.vmem [resolvable:$true] %s26
      %29 = dma.hbm_to_vmem [thread:$0]  %s0, 128, %s27, [#allocation3]
    $region5: #{tpu_custom_call.1} parent=1 // pred_fallthru
      _
    // Predicated region
    $region6: #{tpu_custom_call.1} parent=1 // pred_check
      _
    $region7: #{tpu_custom_call.1} parent=1 // pred_check_branch
      %31 = sbr.rel (0) target = $region9
    $region8: #{tpu_custom_call.1} parent=1 // pred_region
      %s33 = ssub.s32 2048, 2048
      %34 = vsyncadd [#allocation6], %s33
      %s35 = sshll.u32 [#allocation5], 4
      %s36 = int_to_ptr.vmem [resolvable:$true] %s35
      %41 = dma.hbm_to_vmem [thread:$0]  %s1, 2048, %s36, [#allocation6], 128, 128, 8
    $region9: #{tpu_custom_call.1} parent=1 // pred_fallthru
      _
    // Predicated region
    $region10: #{tpu_custom_call.1} parent=1 // pred_check
      _
    $region11: #{tpu_custom_call.1} parent=1 // pred_check_branch
      %43 = sbr.rel (0) target = $region13
    $region12: #{tpu_custom_call.1} parent=1 // pred_region
      _
    $region13: #{tpu_custom_call.1} parent=1 // pred_fallthru
      _
    // Predicated region
    $region14: #{tpu_custom_call.1} parent=1 // pred_check
      _
    $region15: #{tpu_custom_call.1} parent=1 // pred_check_branch
      %45 = sbr.rel (0) target = $region17
    $region16: #{tpu_custom_call.1} parent=1 // pred_region
      _
    $region17: #{tpu_custom_call.1} parent=1 // pred_fallthru
      _
    // Predicated region
    $region18: #{tpu_custom_call.1} parent=1 // pred_check
      _
    $region19: #{tpu_custom_call.1} parent=1 // pred_check_branch
      %47 = sbr.rel (0) target = $region21
    $region20: #{tpu_custom_call.1} parent=1 // pred_region
      _
    $region21: #{tpu_custom_call.1} parent=1 // pred_fallthru
      _
    // Predicated region
    $region22: #{tpu_custom_call.1} parent=1 // pred_check
      _
    $region23: #{tpu_custom_call.1} parent=1 // pred_check_branch
      %49 = sbr.rel (0) target = $region25
    $region24: #{tpu_custom_call.1} parent=1 // pred_region
      %s51 = ssub.s32 2048, 2048
      %52 = vsyncadd [#allocation6], %s51
      %s53 = sshll.u32 [#allocation7], 4
      %s54 = int_to_ptr.vmem [resolvable:$true] %s53
      %59 = dma.hbm_to_vmem [thread:$0]  %s5, 2048, %s54, [#allocation6], 128, 128, 8
    $region25: #{tpu_custom_call.1} parent=1 // pred_fallthru
      _
    // Predicated region
    $region26: #{tpu_custom_call.1} parent=1 // pred_check
      _
    $region27: #{tpu_custom_call.1} parent=1 // pred_check_branch
      %61 = sbr.rel (0) target = $region29
    $region28: #{tpu_custom_call.1} parent=1 // pred_region
      _
    $region29: #{tpu_custom_call.1} parent=1 // pred_fallthru
      _
    // Predicated region
    $region30: #{tpu_custom_call.1} parent=1 // pred_check
      _
    $region31: #{tpu_custom_call.1} parent=1 // pred_check_branch
      %63 = sbr.rel (0) target = $region33
    $region32: #{tpu_custom_call.1} parent=1 // pred_region
      _
    $region33: #{tpu_custom_call.1} parent=1 // pred_fallthru
      _
    // Predicated region
    $region34: #{tpu_custom_call.1} parent=1 // pred_check
      _
    $region35: #{tpu_custom_call.1} parent=1 // pred_check_branch
      %65 = sbr.rel (0) target = $region37
    $region36: #{tpu_custom_call.1} parent=1 // pred_region
      _
    $region37: #{tpu_custom_call.1} parent=1 // pred_fallthru
      _
    // Predicated region
    $region38: #{tpu_custom_call.1} parent=1 // pred_check
      _
    $region39: #{tpu_custom_call.1} parent=1 // pred_check_branch
      %67 = sbr.rel (0) target = $region41
    $region40: #{tpu_custom_call.1} parent=1 // pred_region
      %s69 = ssub.s32 2048, 2048
      %70 = vsyncadd [#allocation9], %s69
      %s71 = sshll.u32 [#allocation8], 4
      %s72 = int_to_ptr.vmem [resolvable:$true] %s71
      %77 = dma.hbm_to_vmem [thread:$0]  %s9, 2048, %s72, [#allocation9], 128, 128, 8
    $region41: #{tpu_custom_call.1} parent=1 // pred_fallthru
      _
    // Predicated region
    $region42: #{tpu_custom_call.1} parent=1 // pred_check
      _
    $region43: #{tpu_custom_call.1} parent=1 // pred_check_branch
      %79 = sbr.rel (0) target = $region45
    $region44: #{tpu_custom_call.1} parent=1 // pred_region
      _
    $region45: #{tpu_custom_call.1} parent=1 // pred_fallthru
      _
    // Predicated region
    $region46: #{tpu_custom_call.1} parent=1 // pred_check
      _
    $region47: #{tpu_custom_call.1} parent=1 // pred_check_branch
      %81 = sbr.rel (0) target = $region49
    $region48: #{tpu_custom_call.1} parent=1 // pred_region
      %82 = dma.done [#allocation3], 128
    $region49: #{tpu_custom_call.1} parent=1 // pred_fallthru
      _
    // Predicated region
    $region50: #{tpu_custom_call.1} parent=1 // pred_check
      _
    $region51: #{tpu_custom_call.1} parent=1 // pred_check_branch
      %84 = sbr.rel (0) target = $region53
    $region52: #{tpu_custom_call.1} parent=1 // pred_region
      %85 = dma.done [#allocation6], 2048
    $region53: #{tpu_custom_call.1} parent=1 // pred_fallthru
      _
    // Predicated region
    $region54: #{tpu_custom_call.1} parent=1 // pred_check
      _
    $region55: #{tpu_custom_call.1} parent=1 // pred_check_branch
      %87 = sbr.rel (0) target = $region57
    $region56: #{tpu_custom_call.1} parent=1 // pred_region
      %88 = dma.done [#allocation6], 2048
    $region57: #{tpu_custom_call.1} parent=1 // pred_fallthru
      _
    // Predicated region
    $region58: #{tpu_custom_call.1} parent=1 // pred_check
      _
    $region59: #{tpu_custom_call.1} parent=1 // pred_check_branch
      %90 = sbr.rel (0) target = $region61
    $region60: #{tpu_custom_call.1} parent=1 // pred_region
      %91 = dma.done [#allocation9], 2048
    $region61: #{tpu_custom_call.1} parent=1 // pred_fallthru
      _
    %v92 = vld [vmem:[#allocation2] sm:$0xff]
    %v93 = vld [vmem:[#allocation5] sm:$0xff]
    %v94 = vld [vmem:[#allocation5 + $0x8] sm:$0xff]
    %v95 = vld [vmem:[#allocation5 + $0x10] sm:$0xff]
    %v96 = vld [vmem:[#allocation5 + $0x18] sm:$0xff]
    %v97 = vld [vmem:[#allocation5 + $0x20] sm:$0xff]
    %v98 = vld [vmem:[#allocation5 + $0x28] sm:$0xff]
    %v99 = vld [vmem:[#allocation5 + $0x30] sm:$0xff]
    %v100 = vld [vmem:[#allocation5 + $0x38] sm:$0xff]
    %v101 = vld [vmem:[#allocation5 + $0x40] sm:$0xff]
    %v102 = vld [vmem:[#allocation5 + $0x48] sm:$0xff]
    %v103 = vld [vmem:[#allocation5 + $0x50] sm:$0xff]
    %v104 = vld [vmem:[#allocation5 + $0x58] sm:$0xff]
    %v105 = vld [vmem:[#allocation5 + $0x60] sm:$0xff]
    %v106 = vld [vmem:[#allocation5 + $0x68] sm:$0xff]
    %v107 = vld [vmem:[#allocation5 + $0x70] sm:$0xff]
    %v108 = vld [vmem:[#allocation5 + $0x78] sm:$0xff]
    %v109 = vld [vmem:[%s2] sm:$0x1]
    %v111 = vlaneseq
    %v112 = vshrl.u32 %v111, 7
    %v113 = vsub.s32 0, %v112
    %v114 = vrot.slane %v109, %v113
    %116 = vmatprep.subr.mxu0 0.0
    %117 = vmatpush1.msra.mxu0 %v93
    %118 = vmatprep.subr.mxu0 0.0
    %119 = vmatpush1.msra.mxu0 %v94
    %120 = vmatprep.subr.mxu0 0.0
    %121 = vmatpush1.msra.mxu0 %v95
    %122 = vmatprep.subr.mxu0 0.0
    %123 = vmatpush1.msra.mxu0 %v96
    %124 = vmatprep.subr.mxu0 0.0
    %125 = vmatpush1.msra.mxu0 %v97
    %126 = vmatprep.subr.mxu0 0.0
    %127 = vmatpush1.msra.mxu0 %v98
    %128 = vmatprep.subr.mxu0 0.0
    %129 = vmatpush1.msra.mxu0 %v99
    %130 = vmatprep.subr.mxu0 0.0
    %131 = vmatpush1.msra.mxu0 %v100
    %132 = vmatprep.subr.mxu0 0.0
    %133 = vmatpush1.msra.mxu0 %v101
    %134 = vmatprep.subr.mxu0 0.0
    %135 = vmatpush1.msra.mxu0 %v102
    %136 = vmatprep.subr.mxu0 0.0
    %137 = vmatpush1.msra.mxu0 %v103
    %138 = vmatprep.subr.mxu0 0.0
    %139 = vmatpush1.msra.mxu0 %v104
    %140 = vmatprep.subr.mxu0 0.0
    %141 = vmatpush1.msra.mxu0 %v105
    %142 = vmatprep.subr.mxu0 0.0
    %143 = vmatpush1.msra.mxu0 %v106
    %144 = vmatprep.subr.mxu0 0.0
    %145 = vmatpush1.msra.mxu0 %v107
    %146 = vmatprep.subr.mxu0 0.0
    %147 = vmatpush1.msra.mxu0 %v108
    %148 = vmatprep.subr.mxu0 0.0
    %149 = vmatpush1.msra.mxu0 0.0
    %150 = vmatprep.subr.mxu0 0.0
    %151 = vmatpush1.msra.mxu0 0.0
    %152 = vmatprep.subr.mxu0 0.0
    %153 = vmatpush1.msra.mxu0 0.0
    %154 = vmatprep.subr.mxu0 0.0
    %155 = vmatpush1.msra.mxu0 0.0
    %156 = vmatprep.subr.mxu0 0.0
    %157 = vmatpush1.msra.mxu0 0.0
    %158 = vmatprep.subr.mxu0 0.0
    %159 = vmatpush1.msra.mxu0 0.0
    %160 = vmatprep.subr.mxu0 0.0
    %161 = vmatpush1.msra.mxu0 0.0
    %162 = vmatprep.subr.mxu0 0.0
    %163 = vmatpush1.msra.mxu0 0.0
    %164 = vmatprep.subr.mxu0 0.0
    %165 = vmatpush1.msra.mxu0 0.0
    %166 = vmatprep.subr.mxu0 0.0
    %167 = vmatpush1.msra.mxu0 0.0
    %168 = vmatprep.subr.mxu0 0.0
    %169 = vmatpush1.msra.mxu0 0.0
    %170 = vmatprep.subr.mxu0 0.0
    %171 = vmatpush1.msra.mxu0 0.0
    %172 = vmatprep.subr.mxu0 0.0
    %173 = vmatpush1.msra.mxu0 0.0
    %174 = vmatprep.subr.mxu0 0.0
    %175 = vmatpush1.msra.mxu0 0.0
    %176 = vmatprep.subr.mxu0 0.0
    %177 = vmatpush1.msra.mxu0 0.0
    %178 = vmatprep.subr.mxu0 0.0
    %179 = vmatpush1.msra.mxu0 0.0
    %180 = vmatprep.mubr.f32.mxu0 0.0
    %181 = vmatmul.mubr.f32.gmra.mrb[0].mxu0 %v92
    %v182 = vpop.f32.mrb[0].mxu0
    %v183 = vadd.f32 %v114, %v182
    %v184 = vpop.f32.mrb[0].mxu0
    %185 = vdwg.mxu0
    %v186 = vld [vmem:[%s3] sm:$0x1]
    %v187 = vld [vmem:[%s4] sm:$0x1]
    %188 = vadd.xlane.f32.xlu0 %v183
    %v189 = vpop.xlane.xlu0 %188
    %v190 = vmul.f32 %v183, %v183
    %191 = vadd.xlane.f32.xlu0 %v190
    %v192 = vpop.xlane.xlu0 %191
    %v193 = vmul.f32 %v189, 0.015625
    %v194 = vmul.f32 %v192, 0.015625
    %v195 = vmul.f32 %v193, %v193
    %v196 = vsub.f32 %v194, %v195
    %v197 = vsub.f32 %v183, %v193
    %v198 = vadd.f32 %v196, 1e-05
    %v199 = vrsqrt.pop %v198
    %v200 = vmul.f32 %v197, %v199
    %v202 = vlaneseq
    %v203 = vshrl.u32 %v202, 7
    %v204 = vsub.s32 0, %v203
    %v205 = vrot.slane %v186, %v204
    %v207 = vmul.f32 %v200, %v205
    %v209 = vlaneseq
    %v210 = vshrl.u32 %v209, 7
    %v211 = vsub.s32 0, %v210
    %v212 = vrot.slane %v187, %v211
    %v214 = vadd.f32 %v207, %v212
    %v215 = vmax.f32 %v214, 0.0
    %v216 = vld [vmem:[#allocation7] sm:$0xff]
    %v217 = vld [vmem:[#allocation7 + $0x8] sm:$0xff]
    %v218 = vld [vmem:[#allocation7 + $0x10] sm:$0xff]
    %v219 = vld [vmem:[#allocation7 + $0x18] sm:$0xff]
    %v220 = vld [vmem:[#allocation7 + $0x20] sm:$0xff]
    %v221 = vld [vmem:[#allocation7 + $0x28] sm:$0xff]
    %v222 = vld [vmem:[#allocation7 + $0x30] sm:$0xff]
    %v223 = vld [vmem:[#allocation7 + $0x38] sm:$0xff]
    %v224 = vld [vmem:[#allocation7 + $0x40] sm:$0xff]
    %v225 = vld [vmem:[#allocation7 + $0x48] sm:$0xff]
    %v226 = vld [vmem:[#allocation7 + $0x50] sm:$0xff]
    %v227 = vld [vmem:[#allocation7 + $0x58] sm:$0xff]
    %v228 = vld [vmem:[#allocation7 + $0x60] sm:$0xff]
    %v229 = vld [vmem:[#allocation7 + $0x68] sm:$0xff]
    %v230 = vld [vmem:[#allocation7 + $0x70] sm:$0xff]
    %v231 = vld [vmem:[#allocation7 + $0x78] sm:$0xff]
    %v232 = vld [vmem:[%s6] sm:$0x1]
    %v234 = vlaneseq
    %v235 = vshrl.u32 %v234, 7
    %v236 = vsub.s32 0, %v235
    %v237 = vrot.slane %v232, %v236
    %239 = vmatprep.subr.mxu0 0.0
    %240 = vmatpush1.msra.mxu0 %v216
    %241 = vmatprep.subr.mxu0 0.0
    %242 = vmatpush1.msra.mxu0 %v217
    %243 = vmatprep.subr.mxu0 0.0
    %244 = vmatpush1.msra.mxu0 %v218
    %245 = vmatprep.subr.mxu0 0.0
    %246 = vmatpush1.msra.mxu0 %v219
    %247 = vmatprep.subr.mxu0 0.0
    %248 = vmatpush1.msra.mxu0 %v220
    %249 = vmatprep.subr.mxu0 0.0
    %250 = vmatpush1.msra.mxu0 %v221
    %251 = vmatprep.subr.mxu0 0.0
    %252 = vmatpush1.msra.mxu0 %v222
    %253 = vmatprep.subr.mxu0 0.0
    %254 = vmatpush1.msra.mxu0 %v223
    %255 = vmatprep.subr.mxu0 0.0
    %256 = vmatpush1.msra.mxu0 %v224
    %257 = vmatprep.subr.mxu0 0.0
    %258 = vmatpush1.msra.mxu0 %v225
    %259 = vmatprep.subr.mxu0 0.0
    %260 = vmatpush1.msra.mxu0 %v226
    %261 = vmatprep.subr.mxu0 0.0
    %262 = vmatpush1.msra.mxu0 %v227
    %263 = vmatprep.subr.mxu0 0.0
    %264 = vmatpush1.msra.mxu0 %v228
    %265 = vmatprep.subr.mxu0 0.0
    %266 = vmatpush1.msra.mxu0 %v229
    %267 = vmatprep.subr.mxu0 0.0
    %268 = vmatpush1.msra.mxu0 %v230
    %269 = vmatprep.subr.mxu0 0.0
    %270 = vmatpush1.msra.mxu0 %v231
    %271 = vmatprep.subr.mxu0 0.0
    %272 = vmatpush1.msra.mxu0 0.0
    %273 = vmatprep.subr.mxu0 0.0
    %274 = vmatpush1.msra.mxu0 0.0
    %275 = vmatprep.subr.mxu0 0.0
    %276 = vmatpush1.msra.mxu0 0.0
    %277 = vmatprep.subr.mxu0 0.0
    %278 = vmatpush1.msra.mxu0 0.0
    %279 = vmatprep.subr.mxu0 0.0
    %280 = vmatpush1.msra.mxu0 0.0
    %281 = vmatprep.subr.mxu0 0.0
    %282 = vmatpush1.msra.mxu0 0.0
    %283 = vmatprep.subr.mxu0 0.0
    %284 = vmatpush1.msra.mxu0 0.0
    %285 = vmatprep.subr.mxu0 0.0
    %286 = vmatpush1.msra.mxu0 0.0
    %287 = vmatprep.subr.mxu0 0.0
    %288 = vmatpush1.msra.mxu0 0.0
    %289 = vmatprep.subr.mxu0 0.0
    %290 = vmatpush1.msra.mxu0 0.0
    %291 = vmatprep.subr.mxu0 0.0
    %292 = vmatpush1.msra.mxu0 0.0
    %293 = vmatprep.subr.mxu0 0.0
    %294 = vmatpush1.msra.mxu0 0.0
    %295 = vmatprep.subr.mxu0 0.0
    %296 = vmatpush1.msra.mxu0 0.0
    %297 = vmatprep.subr.mxu0 0.0
    %298 = vmatpush1.msra.mxu0 0.0
    %299 = vmatprep.subr.mxu0 0.0
    %300 = vmatpush1.msra.mxu0 0.0
    %301 = vmatprep.subr.mxu0 0.0
    %302 = vmatpush1.msra.mxu0 0.0
    %303 = vmatprep.mubr.f32.mxu0 0.0
    %304 = vmatmul.mubr.f32.gmra.mrb[0].mxu0 %v215
    %v305 = vpop.f32.mrb[0].mxu0
    %v306 = vadd.f32 %v237, %v305
    %v307 = vpop.f32.mrb[0].mxu0
    %308 = vdwg.mxu0
    %v309 = vld [vmem:[%s7] sm:$0x1]
    %v310 = vld [vmem:[%s8] sm:$0x1]
    %311 = vadd.xlane.f32.xlu0 %v306
    %v312 = vpop.xlane.xlu0 %311
    %v313 = vmul.f32 %v306, %v306
    %314 = vadd.xlane.f32.xlu0 %v313
    %v315 = vpop.xlane.xlu0 %314
    %v316 = vmul.f32 %v312, 0.015625
    %v317 = vmul.f32 %v315, 0.015625
    %v318 = vmul.f32 %v316, %v316
    %v319 = vsub.f32 %v317, %v318
    %v320 = vsub.f32 %v306, %v316
    %v321 = vadd.f32 %v319, 1e-05
    %v322 = vrsqrt.pop %v321
    %v323 = vmul.f32 %v320, %v322
    %v325 = vlaneseq
    %v326 = vshrl.u32 %v325, 7
    %v327 = vsub.s32 0, %v326
    %v328 = vrot.slane %v309, %v327
    %v330 = vmul.f32 %v323, %v328
    %v332 = vlaneseq
    %v333 = vshrl.u32 %v332, 7
    %v334 = vsub.s32 0, %v333
    %v335 = vrot.slane %v310, %v334
    %v337 = vadd.f32 %v330, %v335
    %v338 = vmax.f32 %v337, 0.0
    %v339 = vld [vmem:[#allocation8] sm:$0xff]
    %v340 = vld [vmem:[#allocation8 + $0x8] sm:$0xff]
    %v341 = vld [vmem:[#allocation8 + $0x10] sm:$0xff]
    %v342 = vld [vmem:[#allocation8 + $0x18] sm:$0xff]
    %v343 = vld [vmem:[#allocation8 + $0x20] sm:$0xff]
    %v344 = vld [vmem:[#allocation8 + $0x28] sm:$0xff]
    %v345 = vld [vmem:[#allocation8 + $0x30] sm:$0xff]
    %v346 = vld [vmem:[#allocation8 + $0x38] sm:$0xff]
    %v347 = vld [vmem:[#allocation8 + $0x40] sm:$0xff]
    %v348 = vld [vmem:[#allocation8 + $0x48] sm:$0xff]
    %v349 = vld [vmem:[#allocation8 + $0x50] sm:$0xff]
    %v350 = vld [vmem:[#allocation8 + $0x58] sm:$0xff]
    %v351 = vld [vmem:[#allocation8 + $0x60] sm:$0xff]
    %v352 = vld [vmem:[#allocation8 + $0x68] sm:$0xff]
    %v353 = vld [vmem:[#allocation8 + $0x70] sm:$0xff]
    %v354 = vld [vmem:[#allocation8 + $0x78] sm:$0xff]
    %v355 = vld [vmem:[%s10] sm:$0x1]
    %v357 = vlaneseq
    %v358 = vshrl.u32 %v357, 7
    %v359 = vsub.s32 0, %v358
    %v360 = vrot.slane %v355, %v359
    %362 = vmatprep.subr.mxu0 0.0
    %363 = vmatpush1.msra.mxu0 %v339
    %364 = vmatprep.subr.mxu0 0.0
    %365 = vmatpush1.msra.mxu0 %v340
    %366 = vmatprep.subr.mxu0 0.0
    %367 = vmatpush1.msra.mxu0 %v341
    %368 = vmatprep.subr.mxu0 0.0
    %369 = vmatpush1.msra.mxu0 %v342
    %370 = vmatprep.subr.mxu0 0.0
    %371 = vmatpush1.msra.mxu0 %v343
    %372 = vmatprep.subr.mxu0 0.0
    %373 = vmatpush1.msra.mxu0 %v344
    %374 = vmatprep.subr.mxu0 0.0
    %375 = vmatpush1.msra.mxu0 %v345
    %376 = vmatprep.subr.mxu0 0.0
    %377 = vmatpush1.msra.mxu0 %v346
    %378 = vmatprep.subr.mxu0 0.0
    %379 = vmatpush1.msra.mxu0 %v347
    %380 = vmatprep.subr.mxu0 0.0
    %381 = vmatpush1.msra.mxu0 %v348
    %382 = vmatprep.subr.mxu0 0.0
    %383 = vmatpush1.msra.mxu0 %v349
    %384 = vmatprep.subr.mxu0 0.0
    %385 = vmatpush1.msra.mxu0 %v350
    %386 = vmatprep.subr.mxu0 0.0
    %387 = vmatpush1.msra.mxu0 %v351
    %388 = vmatprep.subr.mxu0 0.0
    %389 = vmatpush1.msra.mxu0 %v352
    %390 = vmatprep.subr.mxu0 0.0
    %391 = vmatpush1.msra.mxu0 %v353
    %392 = vmatprep.subr.mxu0 0.0
    %393 = vmatpush1.msra.mxu0 %v354
    %394 = vmatprep.subr.mxu0 0.0
    %395 = vmatpush1.msra.mxu0 0.0
    %396 = vmatprep.subr.mxu0 0.0
    %397 = vmatpush1.msra.mxu0 0.0
    %398 = vmatprep.subr.mxu0 0.0
    %399 = vmatpush1.msra.mxu0 0.0
    %400 = vmatprep.subr.mxu0 0.0
    %401 = vmatpush1.msra.mxu0 0.0
    %402 = vmatprep.subr.mxu0 0.0
    %403 = vmatpush1.msra.mxu0 0.0
    %404 = vmatprep.subr.mxu0 0.0
    %405 = vmatpush1.msra.mxu0 0.0
    %406 = vmatprep.subr.mxu0 0.0
    %407 = vmatpush1.msra.mxu0 0.0
    %408 = vmatprep.subr.mxu0 0.0
    %409 = vmatpush1.msra.mxu0 0.0
    %410 = vmatprep.subr.mxu0 0.0
    %411 = vmatpush1.msra.mxu0 0.0
    %412 = vmatprep.subr.mxu0 0.0
    %413 = vmatpush1.msra.mxu0 0.0
    %414 = vmatprep.subr.mxu0 0.0
    %415 = vmatpush1.msra.mxu0 0.0
    %416 = vmatprep.subr.mxu0 0.0
    %417 = vmatpush1.msra.mxu0 0.0
    %418 = vmatprep.subr.mxu0 0.0
    %419 = vmatpush1.msra.mxu0 0.0
    %420 = vmatprep.subr.mxu0 0.0
    %421 = vmatpush1.msra.mxu0 0.0
    %422 = vmatprep.subr.mxu0 0.0
    %423 = vmatpush1.msra.mxu0 0.0
    %424 = vmatprep.subr.mxu0 0.0
    %425 = vmatpush1.msra.mxu0 0.0
    %426 = vmatprep.mubr.f32.mxu0 0.0
    %427 = vmatmul.mubr.f32.gmra.mrb[0].mxu0 %v338
    %v428 = vpop.f32.mrb[0].mxu0
    %v429 = vadd.f32 %v360, %v428
    %v430 = vpop.f32.mrb[0].mxu0
    %431 = vdwg.mxu0
    %432 = vst [vmem:[#allocation10] sm:$0xff] %v429
    // Predicated region
    $region62: #{tpu_custom_call.1} parent=1 // pred_check
      _
    $region63: #{tpu_custom_call.1} parent=1 // pred_check_branch
      %434 = sbr.rel (0) target = $region65
    $region64: #{tpu_custom_call.1} parent=1 // pred_region
      %s436 = ssub.s32 128, 128
      %437 = vsyncadd [#allocation4], %s436
      %s439 = sshll.u32 [#allocation10], 4
      %s440 = int_to_ptr.vmem [resolvable:$true] %s439
      %442 = dma.vmem_to_hbm [thread:$0]  %s440, 128, %s11, [#allocation4]
    $region65: #{tpu_custom_call.1} parent=1 // pred_fallthru
      _
    // Predicated region
    $region66: #{tpu_custom_call.1} parent=1 // pred_check
      _
    $region67: #{tpu_custom_call.1} parent=1 // pred_check_branch
      %444 = sbr.rel (0) target = $region69
    $region68: #{tpu_custom_call.1} parent=1 // pred_region
      %445 = dma.done [#allocation4], 128
    $region69: #{tpu_custom_call.1} parent=1 // pred_fallthru
      _
    %446 = vsyncpa [#allocation3], 1
    %447 = vsyncpa [#allocation6], 1
    %448 = vsyncpa [#allocation9], 1
    %449 = vsyncpa [#allocation4], 1

</llo_original>
